<compile_context>
chip_gen: v6e
topology: v6e:2x2x1
jax: 0.10.0
libtpu: 0.0.40
codegen_flags: <defaults>
</compile_context>

<pallas_src>
import functools

import jax
import jax.numpy as jnp
from jax.experimental import pallas as pl
from jax.experimental.pallas import tpu as pltpu


def _round_up(x, m):
    return ((x + m - 1) // m) * m


def _vmem_capacity_bytes():
    """Physical VMEM of the current generation (fallback: 64 MiB, v7x-safe)."""
    try:
        return int(pltpu.get_tpu_info().vmem_capacity_bytes)
    except Exception:
        return 64 << 20


def _embed_onehot_kernel(lab_ref, table_ref, o_ref, acc_ref):
    """One grid step: gather `tb` embedding rows as a one-hot x table matmul.

    lab_ref   : VMEM (tb, 1)  int32  -- this step's label block
    table_ref : VMEM (tv, H)         -- (tile of) the embedding table
    o_ref     : VMEM (tb, H)         -- output block (lane-dense, unmasked store)
    acc_ref   : VMEM (tb, H)  f32    -- accumulator across the V-tile axis
    """
    k = pl.program_id(1)

    @pl.when(k == 0)
    def _():
        acc_ref[...] = jnp.zeros_like(acc_ref)

    tb = lab_ref.shape[0]
    tv = table_ref.shape[0]

    lab = lab_ref[...]                                            # (tb, 1) int32
    col = jax.lax.broadcasted_iota(jnp.int32, (tb, tv), 1) + k * tv
    hit = lab == col                                              # (tb, tv) bool

    tab = table_ref[...]
    if jnp.issubdtype(tab.dtype, jnp.floating):
        onehot = hit.astype(tab.dtype)
    else:                                    # integer tables: matmul in f32
        onehot = hit.astype(jnp.float32)
        tab = tab.astype(jnp.float32)

    # HIGHEST keeps the f32 gather bit-faithful (multi-pass bf16 on the MXU);
    # for bf16 tables the one-hot matmul is exact anyway.
    prec = jax.lax.Precision.HIGHEST if tab.dtype == jnp.float32 else None
    acc_ref[...] += jnp.dot(onehot, tab,
                            preferred_element_type=jnp.float32,
                            precision=prec)

    @pl.when(k == pl.num_programs(1) - 1)
    def _():
        o_ref[...] = acc_ref[...].astype(o_ref.dtype)


@functools.partial(jax.jit, static_argnames=("block_rows",))
def _embedding_lookup(labels_flat, table, *, block_rows=256):
    """labels_flat: (N,) int; table: (V, H). Returns (N, H) of table.dtype."""
    n = labels_flat.shape[0]
    v, h = table.shape
    dt = jnp.dtype(table.dtype)
    itemsize = dt.itemsize

    # dtype-aware sublane rounding for the output row tile.
    sub = {4: 8, 2: 16, 1: 32}.get(itemsize, 8)
    if n <= block_rows:
        tb = max(sub, _round_up(n, sub))     # cover the whole batch in one step
    else:
        tb = _round_up(block_rows, sub)
    n_pad = _round_up(n, tb)
    n_blocks = n_pad // tb

    lab2d = jnp.pad(labels_flat.astype(jnp.int32),
                    (0, n_pad - n)).reshape(n_pad, 1)   # pad -> row 0 (discarded)

    # ---- VMEM budgeting (generation aware) ---------------------------------
    cap = _vmem_capacity_bytes()
    fixed = (2 * tb * h * itemsize          # double-buffered output blocks
             + 2 * tb * 128 * 4             # label blocks (lane padded)
             + tb * h * 4                   # f32 accumulator scratch
             + (2 << 20))                   # pipeline / compiler slack
    table_bytes = v * h * itemsize

    if table_bytes + fixed <= cap // 2:
        # Table fits comfortably: keep it VMEM-resident across all steps.
        v_blocks, tv = 1, v
        table_arr = table
        if table_bytes > (4 << 20) and hasattr(pl, "Buffered"):
            # Large resident table: single-buffer it (constant index map -> one DMA).
            try:
                table_spec = pl.BlockSpec((v, h), lambda i, k: (0, 0),
                                          pipeline_mode=pl.Buffered(1))
                table_worst = table_bytes
            except TypeError:
                table_spec = pl.BlockSpec((v, h), lambda i, k: (0, 0))
                table_worst = 2 * table_bytes
        else:
            table_spec = pl.BlockSpec((v, h), lambda i, k: (0, 0))
            table_worst = 2 * table_bytes
    else:
        # Table too big for this generation's VMEM (e.g. large vocab on v7x):
        # tile it over an innermost "arbitrary" grid axis and accumulate.
        avail = max(cap // 2 - fixed, 2 * sub * h * itemsize)
        tv = max(sub, (avail // (2 * h * itemsize)) // sub * sub)
        v_pad = _round_up(v, tv)
        v_blocks = v_pad // tv
        table_arr = jnp.pad(table, ((0, v_pad - v), (0, 0)))   # zero rows never hit
        table_spec = pl.BlockSpec((tv, h), lambda i, k: (k, 0))
        table_worst = 2 * tv * h * itemsize

    vmem_limit = int(min(cap, max(32 << 20, fixed + table_worst + (4 << 20))))

    # Only split rows across TensorCores when there is enough work to amortize
    # the duplicated table DMA (v7x dual-TC; no-op on v5e/v6e).
    row_sem = "parallel" if n_blocks >= 8 else "arbitrary"

    out = pl.pallas_call(
        _embed_onehot_kernel,
        out_shape=jax.ShapeDtypeStruct((n_pad, h), dt),
        grid_spec=pltpu.PrefetchScalarGridSpec(
            num_scalar_prefetch=0,
            grid=(n_blocks, v_blocks),
            in_specs=[
                pl.BlockSpec((tb, 1), lambda i, k: (i, 0)),   # label block
                table_spec,                                   # table (tile)
            ],
            out_specs=pl.BlockSpec((tb, h), lambda i, k: (i, 0)),
            scratch_shapes=[pltpu.VMEM((tb, h), jnp.float32)],
        ),
        compiler_params=pltpu.CompilerParams(
            dimension_semantics=(row_sem, "arbitrary"),
            vmem_limit_bytes=vmem_limit,
        ),
        cost_estimate=pl.CostEstimate(
            flops=int(2 * n_pad * v_blocks * tv * h),
            transcendentals=0,
            bytes_accessed=int(table_arr.size * itemsize   # table read
                               + n_pad * 4                 # labels
                               + n_pad * h * itemsize),    # output write
        ),
    )(lab2d, table_arr)

    return out[:n]


def gen2d_label_embedder(labels, embedding_table, *, num_classes, dropout_prob,
                         train=False, force_drop_ids=None, rng_key=None,
                         block_rows=256):
    """JAX/Pallas equivalent of Gen2DLabelEmbedder.forward.

    labels:           integer array of class ids, shape (...,)
    embedding_table:  (num_classes + use_cfg_embedding, hidden_size)
    Returns embeddings of shape (..., hidden_size).
    """
    use_dropout = dropout_prob > 0
    if (train and use_dropout) or (force_drop_ids is not None):
        if force_drop_ids is None:
            if rng_key is None:
                raise ValueError("rng_key is required for stochastic token_drop")
            drop_ids = jax.random.uniform(rng_key, labels.shape) < dropout_prob
        else:
            drop_ids = force_drop_ids == 1
        labels = jnp.where(drop_ids, num_classes, labels)

    lead_shape = labels.shape
    flat = labels.reshape(-1)
    out = _embedding_lookup(flat, embedding_table, block_rows=block_rows)
    return out.reshape(*lead_shape, embedding_table.shape[1])


if __name__ == "__main__":
    key = jax.random.PRNGKey(0)
    k_lab, k_tab, k_lab2 = jax.random.split(key, 3)

    num_classes, hidden_size, dropout_prob = 10, 128, 0.1
    vocab = num_classes + 1   # +1 CFG row because dropout_prob > 0
    embedding_table = 0.02 * jax.random.normal(
        k_tab, (vocab, hidden_size), jnp.float32)

    # --- Case 1: eval path (train=False), small batch -> single grid step ---
    batch = 32
    labels = jax.random.randint(k_lab, (batch,), 0, num_classes)
    y = gen2d_label_embedder(labels, embedding_table,
                             num_classes=num_classes,
                             dropout_prob=dropout_prob, train=False)
    y = jax.block_until_ready(y)
    assert y.shape == (batch, hidden_size)
    assert jnp.allclose(y, embedding_table[labels], atol=1e-3, rtol=1e-2), \
        "eval-path mismatch vs reference gather"

    # --- Case 2: CFG path with deterministic forced drops -------------------
    force_drop_ids = (jnp.arange(batch) % 4 == 0).astype(jnp.int32)
    y2 = gen2d_label_embedder(labels, embedding_table,
                              num_classes=num_classes,
                              dropout_prob=dropout_prob,
                              train=True, force_drop_ids=force_drop_ids)
    y2 = jax.block_until_ready(y2)
    dropped = jnp.where(force_drop_ids == 1, num_classes, labels)
    assert jnp.allclose(y2, embedding_table[dropped], atol=1e-3, rtol=1e-2), \
        "CFG-drop path mismatch vs reference gather"

    # --- Case 3: larger batch -> multi-row-block grid + row padding ---------
    big = 300
    labels_big = jax.random.randint(k_lab2, (big,), 0, num_classes)
    y3 = gen2d_label_embedder(labels_big, embedding_table,
                              num_classes=num_classes,
                              dropout_prob=dropout_prob,
                              train=False, block_rows=128)
    y3 = jax.block_until_ready(y3)
    assert y3.shape == (big, hidden_size)
    assert jnp.allclose(y3, embedding_table[labels_big], atol=1e-3, rtol=1e-2), \
        "multi-block path mismatch vs reference gather"

    print("KERNEL_OK")
</pallas_src>

<mosaic_0001>
module attributes {stable_mosaic.version = 11 : i64} {
  func.func @_embed_onehot_kernel(%arg0: i32, %arg1: i32, %arg2: memref<32x1xi32, #tpu.memory_space<vmem>>, %arg3: memref<11x128xf32, #tpu.memory_space<vmem>>, %arg4: memref<32x128xf32, #tpu.memory_space<vmem>>, %arg5: memref<32x128xf32, #tpu.memory_space<vmem>>) attributes {dimension_semantics = [#tpu.dimension_semantics<arbitrary>, #tpu.dimension_semantics<arbitrary>], iteration_bounds = array<i64: 1, 1>, scalar_prefetch = 0 : i64, scratch_operands = 1 : i64, tpu.core_type = #tpu.core_type<tc>, window_params = [{transform_indices = @transform_0, window_bounds = array<i64: 32, 1>}, {pipeline_mode = #tpu.pipeline_mode<synchronous>, transform_indices = @transform_1, window_bounds = array<i64: 11, 128>}, {transform_indices = @transform_2, window_bounds = array<i64: 32, 128>}]} {
    %c0_i32 = arith.constant 0 : i32
    %0 = arith.cmpi eq, %arg1, %c0_i32 : i32
    %1 = arith.extui %0 : i1 to i32
    %c0_i32_0 = arith.constant 0 : i32
    %2 = arith.cmpi ne, %1, %c0_i32_0 : i32
    scf.if %2 {
      %cst_10 = arith.constant 0.000000e+00 : f32
      %20 = vector.broadcast %cst_10 : f32 to vector<32x128xf32>
      %c0_11 = arith.constant 0 : index
      %c0_12 = arith.constant 0 : index
      %21 = vector.load %arg5[%c0_11, %c0_12] : memref<32x128xf32, #tpu.memory_space<vmem>>, vector<32x128xf32>
      tpu.vector_store %arg5[%c0_11, %c0_12], %20 {strides = array<i32>} : memref<32x128xf32, #tpu.memory_space<vmem>>, vector<32x128xf32>,
    } else {
    }
    %c0 = arith.constant 0 : index
    %c0_1 = arith.constant 0 : index
    %3 = vector.load %arg2[%c0, %c0_1] : memref<32x1xi32, #tpu.memory_space<vmem>>, vector<32x1xi32>
    %4 = tpu.iota {dimensions = array<i32: 1>} : vector<32x11xi32>
    %c11_i32 = arith.constant 11 : i32
    %5 = arith.muli %arg1, %c11_i32 : i32
    %6 = vector.broadcast %5 : i32 to vector<32x11xi32>
    %7 = arith.addi %4, %6 : vector<32x11xi32>
    %8 = vector.broadcast %3 : vector<32x1xi32> to vector<32x11xi32>
    %9 = arith.cmpi eq, %8, %7 : vector<32x11xi32>
    %c0_2 = arith.constant 0 : index
    %c0_3 = arith.constant 0 : index
    %10 = vector.load %arg3[%c0_2, %c0_3] : memref<11x128xf32, #tpu.memory_space<vmem>>, vector<11x128xf32>
    %11 = arith.extui %9 : vector<32x11xi1> to vector<32x11xi32>
    %12 = arith.sitofp %11 : vector<32x11xi32> to vector<32x11xf32>
    %c0_4 = arith.constant 0 : index
    %c0_5 = arith.constant 0 : index
    %13 = vector.load %arg5[%c0_4, %c0_5] : memref<32x128xf32, #tpu.memory_space<vmem>>, vector<32x128xf32>
    %cst = arith.constant dense<0.000000e+00> : vector<32x128xf32>
    %14 = tpu.matmul %12, %10, %cst {dimension_numbers = #tpu.dot_dimension_numbers<[1], [0], [0], [1], [0, 0, 1, 1], [], []>, precision = #tpu.contract_precision<fp32>} : vector<32x11xf32>, vector<11x128xf32>, vector<32x128xf32> -> vector<32x128xf32>
    %15 = arith.addf %13, %14 : vector<32x128xf32>
    %c0_6 = arith.constant 0 : index
    %c0_7 = arith.constant 0 : index
    %16 = vector.load %arg5[%c0_6, %c0_7] : memref<32x128xf32, #tpu.memory_space<vmem>>, vector<32x128xf32>
    tpu.vector_store %arg5[%c0_6, %c0_7], %15 {strides = array<i32>} : memref<32x128xf32, #tpu.memory_space<vmem>>, vector<32x128xf32>,
    %c0_i32_8 = arith.constant 0 : i32
    %17 = arith.cmpi eq, %arg1, %c0_i32_8 : i32
    %18 = arith.extui %17 : i1 to i32
    %c0_i32_9 = arith.constant 0 : i32
    %19 = arith.cmpi ne, %18, %c0_i32_9 : i32
    scf.if %19 {
      %c0_10 = arith.constant 0 : index
      %c0_11 = arith.constant 0 : index
      %20 = vector.load %arg5[%c0_10, %c0_11] : memref<32x128xf32, #tpu.memory_space<vmem>>, vector<32x128xf32>
      %c0_12 = arith.constant 0 : index
      %c0_13 = arith.constant 0 : index
      %21 = vector.load %arg4[%c0_12, %c0_13] : memref<32x128xf32, #tpu.memory_space<vmem>>, vector<32x128xf32>
      tpu.vector_store %arg4[%c0_12, %c0_13], %20 {strides = array<i32>} : memref<32x128xf32, #tpu.memory_space<vmem>>, vector<32x128xf32>,
    } else {
    }
    return
  }
  func.func @transform_0(%arg0: i32, %arg1: i32) -> (i32, i32) {
    %c0_i32 = arith.constant 0 : i32
    %c0_i32_0 = arith.constant 0 : i32
    return %arg0, %c0_i32 : i32, i32
  }
  func.func @transform_1(%arg0: i32, %arg1: i32) -> (i32, i32) {
    %c0_i32 = arith.constant 0 : i32
    %c0_i32_0 = arith.constant 0 : i32
    %c0_i32_1 = arith.constant 0 : i32
    return %c0_i32, %c0_i32_0 : i32, i32
  }
  func.func @transform_2(%arg0: i32, %arg1: i32) -> (i32, i32) {
    %c0_i32 = arith.constant 0 : i32
    %c0_i32_0 = arith.constant 0 : i32
    return %arg0, %c0_i32 : i32, i32
  }
}

</mosaic_0001>

<llo_original>
// kernel: _embedding_lookup.1
$region0: #{_embedding_lookup.1}
  #allocation0 [shape = 'u32[]', space=smem, size = 0x4, offset = 0x4, fixed_abs, tag = 'smem constant byte address 0x4 - core index']
  #allocation1 [shape = 'u32[144,128]{1,0:T(1,128)}', space=vmem, size = 0x12000, scoped, tag = 'internal scratch']
  #allocation2 [shape = 'f32[32,128]{1,0:T(8,128)}', space=vmem, size = 0x4000, scoped, tag = 'scratch operand']
  %s0 = inlined_call_operand.vmem [shape: s32[32,1], index: 0, kind: input, shape index: {}]
  %s1 = inlined_call_operand.vmem [shape: f32[11,128], index: 1, kind: input, shape index: {}]
  %s2 = inlined_call_operand.hbm [shape: f32[32,128], index: 2, kind: output, shape index: {}]
  %s3 = sld [smem:[#allocation0]]
  $region26: #{_embedding_lookup.1} parent=0
    _
  %s5 = ssub.s32 1, %s3
  %s6 = scalar_select 0, %s5, %s3
  $region1: #{_embedding_lookup.1} parent=0
    #allocation3 [shape = 'u8[16384]{0}', space=vmem, size = 0x4000, scoped, tag = 'output window, operand 0, single buffered']
    #allocation4 [shape = 's32[1]{0}', space=sflag, size = 0x4, scoped, tag = 'scoped memory for _embedding_lookup.1']
    %7 = vsyncpa [#allocation4], 0
    // Predicated region
    $region2: #{_embedding_lookup.1} parent=1 // pred_check
      _
    $region3: #{_embedding_lookup.1} parent=1 // pred_check_branch
      %9 = sbr.rel (0) target = $region5
    $region4: #{_embedding_lookup.1} parent=1 // pred_region
      _
    $region5: #{_embedding_lookup.1} parent=1 // pred_fallthru
      _
    // Predicated region
    $region6: #{_embedding_lookup.1} parent=1 // pred_check
      _
    $region7: #{_embedding_lookup.1} parent=1 // pred_check_branch
      %11 = sbr.rel (0) target = $region9
    $region8: #{_embedding_lookup.1} parent=1 // pred_region
      _
    $region9: #{_embedding_lookup.1} parent=1 // pred_fallthru
      _
    %p12 = scmp.eq.s32.totalorder 0, 0
    // Predicated region
    $region10: #{_embedding_lookup.1} parent=1 // pred_check
      %p13 = pneg %p12
    $region11: #{_embedding_lookup.1} parent=1 // pred_check_branch
      %15 = sbr.rel (%p13) target = $region13
    $region12: #{_embedding_lookup.1} parent=1 // pred_region
      %16 = vst [vmem:[#allocation2] sm:$0xff] 0.0
      %17 = vst [vmem:[#allocation2 + $0x8] sm:$0xff] 0.0
      %18 = vst [vmem:[#allocation2 + $0x10] sm:$0xff] 0.0
      %19 = vst [vmem:[#allocation2 + $0x18] sm:$0xff] 0.0
    $region13: #{_embedding_lookup.1} parent=1 // pred_fallthru
      _
    %v20 = vld [vmem:[%s0] sm:$0xff]
    %v21 = vld [vmem:[%s0 + $0x8] sm:$0xff]
    %v22 = vld [vmem:[%s0 + $0x10] sm:$0xff]
    %v23 = vld [vmem:[%s0 + $0x18] sm:$0xff]
    %v24 = vlaneseq
    %v25 = vand.u32 %v24, 127
    %s26 = smul.u32 0, 11
    %v27 = vstv %s26
    %v28 = vadd.s32 %v25, %v27
    %29 = vset.pattern.permute.xlu0 0
    %30 = vperm.xlu0 %29, %v20
    %v31 = vpop.permute.xlu0 %30
    %32 = vset.pattern.permute.xlu0 0
    %33 = vperm.xlu0 %32, %v21
    %v34 = vpop.permute.xlu0 %33
    %35 = vset.pattern.permute.xlu0 0
    %36 = vperm.xlu0 %35, %v22
    %v37 = vpop.permute.xlu0 %36
    %38 = vset.pattern.permute.xlu0 0
    %39 = vperm.xlu0 %38, %v23
    %v40 = vpop.permute.xlu0 %39
    %vm41 = vcmp.eq.s32.totalorder %v31, %v28
    %vm42 = vcmp.eq.s32.totalorder %v34, %v28
    %vm43 = vcmp.eq.s32.totalorder %v37, %v28
    %vm44 = vcmp.eq.s32.totalorder %v40, %v28
    %v45 = vld [vmem:[%s1] sm:$0xff]
    %v46 = vld [vmem:[%s1 + $0x8] sm:$0x7]
    %v47 = vsel %vm41, 1, 0
    %v48 = vsel %vm42, 1, 0
    %v49 = vsel %vm43, 1, 0
    %v50 = vsel %vm44, 1, 0
    %v51 = vcvt.s32.f32 %v47
    %v52 = vcvt.s32.f32 %v48
    %v53 = vcvt.s32.f32 %v49
    %v54 = vcvt.s32.f32 %v50
    %v55 = vld [vmem:[#allocation2] sm:$0xff]
    %v56 = vld [vmem:[#allocation2 + $0x8] sm:$0xff]
    %v57 = vld [vmem:[#allocation2 + $0x10] sm:$0xff]
    %v58 = vld [vmem:[#allocation2 + $0x18] sm:$0xff]
    %vm59 = vcmask 89088
    %v61 = vsel %vm59, %v51, 0
    %v64 = vsel %vm59, %v52, 0
    %v67 = vsel %vm59, %v53, 0
    %v70 = vsel %vm59, %v54, 0
    %vm72 = vcmask 1042432
    %v74 = vsel %vm72, %v46, 0
    %76 = vmatprep.subr.mxu0 0.0
    %77 = vmatpush1.msra.mxu0 0.0
    %78 = vmatprep.subr.mxu0 0.0
    %79 = vmatpush1.msra.mxu0 0.0
    %80 = vmatprep.subr.mxu0 0.0
    %81 = vmatpush1.msra.mxu0 0.0
    %82 = vmatprep.subr.mxu0 0.0
    %83 = vmatpush1.msra.mxu0 0.0
    %84 = vmatprep.subr.mxu0 0.0
    %85 = vmatpush1.msra.mxu0 0.0
    %86 = vmatprep.subr.mxu0 0.0
    %87 = vmatpush1.msra.mxu0 0.0
    %88 = vmatprep.subr.mxu0 0.0
    %89 = vmatpush1.msra.mxu0 0.0
    %90 = vmatprep.subr.mxu0 0.0
    %91 = vmatpush1.msra.mxu0 0.0
    %92 = vmatprep.subr.mxu0 0.0
    %93 = vmatpush1.msra.mxu0 0.0
    %94 = vmatprep.subr.mxu0 0.0
    %95 = vmatpush1.msra.mxu0 0.0
    %96 = vmatprep.subr.mxu0 0.0
    %97 = vmatpush1.msra.mxu0 0.0
    %98 = vmatprep.subr.mxu0 0.0
    %99 = vmatpush1.msra.mxu0 0.0
    %100 = vmatprep.subr.mxu0 0.0
    %101 = vmatpush1.msra.mxu0 0.0
    %102 = vmatprep.subr.mxu0 0.0
    %103 = vmatpush1.msra.mxu0 0.0
    %104 = vmatprep.subr.mxu0 0.0
    %v105 = vand.u32 %v74, 4294901760
    %106 = vmatpush1.msra.mxu0 %v105
    %107 = vmatprep.subr.mxu0 0.0
    %v108 = vand.u32 %v45, 4294901760
    %109 = vmatpush1.msra.mxu0 %v108
    %110 = vmatprep.subr.mxu0 0.0
    %111 = vmatpush2.msra.mxu0 0.0
    %112 = vmatprep.subr.mxu0 0.0
    %113 = vmatpush2.msra.mxu0 0.0
    %114 = vmatprep.subr.mxu0 0.0
    %115 = vmatpush2.msra.mxu0 0.0
    %116 = vmatprep.subr.mxu0 0.0
    %117 = vmatpush2.msra.mxu0 0.0
    %118 = vmatprep.subr.mxu0 0.0
    %119 = vmatpush2.msra.mxu0 0.0
    %120 = vmatprep.subr.mxu0 0.0
    %121 = vmatpush2.msra.mxu0 0.0
    %122 = vmatprep.subr.mxu0 0.0
    %123 = vmatpush2.msra.mxu0 0.0
    %124 = vmatprep.subr.mxu0 0.0
    %125 = vmatpush2.msra.mxu0 0.0
    %126 = vmatprep.subr.mxu0 0.0
    %127 = vmatpush2.msra.mxu0 0.0
    %128 = vmatprep.subr.mxu0 0.0
    %129 = vmatpush2.msra.mxu0 0.0
    %130 = vmatprep.subr.mxu0 0.0
    %131 = vmatpush2.msra.mxu0 0.0
    %132 = vmatprep.subr.mxu0 0.0
    %133 = vmatpush2.msra.mxu0 0.0
    %134 = vmatprep.subr.mxu0 0.0
    %135 = vmatpush2.msra.mxu0 0.0
    %136 = vmatprep.subr.mxu0 0.0
    %137 = vmatpush2.msra.mxu0 0.0
    %138 = vmatprep.subr.mxu0 0.0
    %139 = vmatpush2.msra.mxu0 0.0
    %140 = vmatprep.subr.mxu0 0.0
    %141 = vmatpush2.msra.mxu0 0.0
    %142 = vmatprep.mubr.f32.mxu0 0.0
    %v143 = vand.u32 %v61, 4294901760
    %v144 = vsub.f32 %v61, %v143
    %v145 = vand.u32 %v144, 4294901760
    %v146 = vsub.f32 %v144, %v145
    %v147 = vand.u32 %v146, 4294901760
    %148 = vmatmul.mubr.f32.gmra.mxu0 %v147
    %v149 = vpop.f32.mrf.mxu0
    %v150 = vadd.f32 0.0, %v149
    %v151 = vpop.f32.mrf.mxu0
    %152 = vmatprep.mubr.f32.mxu0 0.0
    %v153 = vand.u32 %v64, 4294901760
    %v154 = vsub.f32 %v64, %v153
    %v155 = vand.u32 %v154, 4294901760
    %v156 = vsub.f32 %v154, %v155
    %v157 = vand.u32 %v156, 4294901760
    %158 = vmatmul.mubr.f32.gmra.mxu0 %v157
    %v159 = vpop.f32.mrf.mxu0
    %v160 = vadd.f32 0.0, %v159
    %v161 = vpop.f32.mrf.mxu0
    %162 = vmatprep.mubr.f32.mxu0 0.0
    %v163 = vand.u32 %v67, 4294901760
    %v164 = vsub.f32 %v67, %v163
    %v165 = vand.u32 %v164, 4294901760
    %v166 = vsub.f32 %v164, %v165
    %v167 = vand.u32 %v166, 4294901760
    %168 = vmatmul.mubr.f32.gmra.mxu0 %v167
    %v169 = vpop.f32.mrf.mxu0
    %v170 = vadd.f32 0.0, %v169
    %v171 = vpop.f32.mrf.mxu0
    %172 = vmatprep.mubr.f32.mxu0 0.0
    %v173 = vand.u32 %v70, 4294901760
    %v174 = vsub.f32 %v70, %v173
    %v175 = vand.u32 %v174, 4294901760
    %v176 = vsub.f32 %v174, %v175
    %v177 = vand.u32 %v176, 4294901760
    %178 = vmatmul.mubr.f32.gmra.mxu0 %v177
    %v179 = vpop.f32.mrf.mxu0
    %v180 = vadd.f32 0.0, %v179
    %v181 = vpop.f32.mrf.mxu0
    %182 = vdwg.mxu0
    %183 = vmatprep.subr.mxu0 0.0
    %184 = vmatpush1.msra.mxu0 0.0
    %185 = vmatprep.subr.mxu0 0.0
    %186 = vmatpush1.msra.mxu0 0.0
    %187 = vmatprep.subr.mxu0 0.0
    %188 = vmatpush1.msra.mxu0 0.0
    %189 = vmatprep.subr.mxu0 0.0
    %190 = vmatpush1.msra.mxu0 0.0
    %191 = vmatprep.subr.mxu0 0.0
    %192 = vmatpush1.msra.mxu0 0.0
    %193 = vmatprep.subr.mxu0 0.0
    %194 = vmatpush1.msra.mxu0 0.0
    %195 = vmatprep.subr.mxu0 0.0
    %196 = vmatpush1.msra.mxu0 0.0
    %197 = vmatprep.subr.mxu0 0.0
    %198 = vmatpush1.msra.mxu0 0.0
    %199 = vmatprep.subr.mxu0 0.0
    %200 = vmatpush1.msra.mxu0 0.0
    %201 = vmatprep.subr.mxu0 0.0
    %202 = vmatpush1.msra.mxu0 0.0
    %203 = vmatprep.subr.mxu0 0.0
    %204 = vmatpush1.msra.mxu0 0.0
    %205 = vmatprep.subr.mxu0 0.0
    %206 = vmatpush1.msra.mxu0 0.0
    %207 = vmatprep.subr.mxu0 0.0
    %208 = vmatpush1.msra.mxu0 0.0
    %209 = vmatprep.subr.mxu0 0.0
    %210 = vmatpush1.msra.mxu0 0.0
    %211 = vmatprep.subr.mxu0 0.0
    %v212 = vand.u32 %v74, 4294901760
    %v213 = vsub.f32 %v74, %v212
    %v214 = vand.u32 %v213, 4294901760
    %v215 = vsub.f32 %v213, %v214
    %v216 = vand.u32 %v215, 4294901760
    %217 = vmatpush1.msra.mxu0 %v216
    %218 = vmatprep.subr.mxu0 0.0
    %v219 = vand.u32 %v45, 4294901760
    %v220 = vsub.f32 %v45, %v219
    %v221 = vand.u32 %v220, 4294901760
    %v222 = vsub.f32 %v220, %v221
    %v223 = vand.u32 %v222, 4294901760
    %224 = vmatpush1.msra.mxu0 %v223
    %225 = vmatprep.subr.mxu0 0.0
    %226 = vmatpush2.msra.mxu0 0.0
    %227 = vmatprep.subr.mxu0 0.0
    %228 = vmatpush2.msra.mxu0 0.0
    %229 = vmatprep.subr.mxu0 0.0
    %230 = vmatpush2.msra.mxu0 0.0
    %231 = vmatprep.subr.mxu0 0.0
    %232 = vmatpush2.msra.mxu0 0.0
    %233 = vmatprep.subr.mxu0 0.0
    %234 = vmatpush2.msra.mxu0 0.0
    %235 = vmatprep.subr.mxu0 0.0
    %236 = vmatpush2.msra.mxu0 0.0
    %237 = vmatprep.subr.mxu0 0.0
    %238 = vmatpush2.msra.mxu0 0.0
    %239 = vmatprep.subr.mxu0 0.0
    %240 = vmatpush2.msra.mxu0 0.0
    %241 = vmatprep.subr.mxu0 0.0
    %242 = vmatpush2.msra.mxu0 0.0
    %243 = vmatprep.subr.mxu0 0.0
    %244 = vmatpush2.msra.mxu0 0.0
    %245 = vmatprep.subr.mxu0 0.0
    %246 = vmatpush2.msra.mxu0 0.0
    %247 = vmatprep.subr.mxu0 0.0
    %248 = vmatpush2.msra.mxu0 0.0
    %249 = vmatprep.subr.mxu0 0.0
    %250 = vmatpush2.msra.mxu0 0.0
    %251 = vmatprep.subr.mxu0 0.0
    %252 = vmatpush2.msra.mxu0 0.0
    %253 = vmatprep.subr.mxu0 0.0
    %254 = vmatpush2.msra.mxu0 0.0
    %255 = vmatprep.subr.mxu0 0.0
    %256 = vmatpush2.msra.mxu0 0.0
    %257 = vmatprep.mubr.f32.mxu0 0.0
    %v258 = vand.u32 %v61, 4294901760
    %259 = vmatmul.mubr.f32.gmra.mxu0 %v258
    %v260 = vpop.f32.mrf.mxu0
    %v261 = vadd.f32 %v150, %v260
    %v262 = vpop.f32.mrf.mxu0
    %263 = vmatprep.mubr.f32.mxu0 0.0
    %v264 = vand.u32 %v64, 4294901760
    %265 = vmatmul.mubr.f32.gmra.mxu0 %v264
    %v266 = vpop.f32.mrf.mxu0
    %v267 = vadd.f32 %v160, %v266
    %v268 = vpop.f32.mrf.mxu0
    %269 = vmatprep.mubr.f32.mxu0 0.0
    %v270 = vand.u32 %v67, 4294901760
    %271 = vmatmul.mubr.f32.gmra.mxu0 %v270
    %v272 = vpop.f32.mrf.mxu0
    %v273 = vadd.f32 %v170, %v272
    %v274 = vpop.f32.mrf.mxu0
    %275 = vmatprep.mubr.f32.mxu0 0.0
    %v276 = vand.u32 %v70, 4294901760
    %277 = vmatmul.mubr.f32.gmra.mxu0 %v276
    %v278 = vpop.f32.mrf.mxu0
    %v279 = vadd.f32 %v180, %v278
    %v280 = vpop.f32.mrf.mxu0
    %281 = vdwg.mxu0
    %282 = vmatprep.subr.mxu0 0.0
    %283 = vmatpush1.msra.mxu0 0.0
    %284 = vmatprep.subr.mxu0 0.0
    %285 = vmatpush1.msra.mxu0 0.0
    %286 = vmatprep.subr.mxu0 0.0
    %287 = vmatpush1.msra.mxu0 0.0
    %288 = vmatprep.subr.mxu0 0.0
    %289 = vmatpush1.msra.mxu0 0.0
    %290 = vmatprep.subr.mxu0 0.0
    %291 = vmatpush1.msra.mxu0 0.0
    %292 = vmatprep.subr.mxu0 0.0
    %293 = vmatpush1.msra.mxu0 0.0
    %294 = vmatprep.subr.mxu0 0.0
    %295 = vmatpush1.msra.mxu0 0.0
    %296 = vmatprep.subr.mxu0 0.0
    %297 = vmatpush1.msra.mxu0 0.0
    %298 = vmatprep.subr.mxu0 0.0
    %299 = vmatpush1.msra.mxu0 0.0
    %300 = vmatprep.subr.mxu0 0.0
    %301 = vmatpush1.msra.mxu0 0.0
    %302 = vmatprep.subr.mxu0 0.0
    %303 = vmatpush1.msra.mxu0 0.0
    %304 = vmatprep.subr.mxu0 0.0
    %305 = vmatpush1.msra.mxu0 0.0
    %306 = vmatprep.subr.mxu0 0.0
    %307 = vmatpush1.msra.mxu0 0.0
    %308 = vmatprep.subr.mxu0 0.0
    %309 = vmatpush1.msra.mxu0 0.0
    %310 = vmatprep.subr.mxu0 0.0
    %v311 = vand.u32 %v74, 4294901760
    %v312 = vsub.f32 %v74, %v311
    %313 = vmatpush1.msra.mxu0 %v312
    %314 = vmatprep.subr.mxu0 0.0
    %v315 = vand.u32 %v45, 4294901760
    %v316 = vsub.f32 %v45, %v315
    %317 = vmatpush1.msra.mxu0 %v316
    %318 = vmatprep.subr.mxu0 0.0
    %319 = vmatpush2.msra.mxu0 0.0
    %320 = vmatprep.subr.mxu0 0.0
    %321 = vmatpush2.msra.mxu0 0.0
    %322 = vmatprep.subr.mxu0 0.0
    %323 = vmatpush2.msra.mxu0 0.0
    %324 = vmatprep.subr.mxu0 0.0
    %325 = vmatpush2.msra.mxu0 0.0
    %326 = vmatprep.subr.mxu0 0.0
    %327 = vmatpush2.msra.mxu0 0.0
    %328 = vmatprep.subr.mxu0 0.0
    %329 = vmatpush2.msra.mxu0 0.0
    %330 = vmatprep.subr.mxu0 0.0
    %331 = vmatpush2.msra.mxu0 0.0
    %332 = vmatprep.subr.mxu0 0.0
    %333 = vmatpush2.msra.mxu0 0.0
    %334 = vmatprep.subr.mxu0 0.0
    %335 = vmatpush2.msra.mxu0 0.0
    %336 = vmatprep.subr.mxu0 0.0
    %337 = vmatpush2.msra.mxu0 0.0
    %338 = vmatprep.subr.mxu0 0.0
    %339 = vmatpush2.msra.mxu0 0.0
    %340 = vmatprep.subr.mxu0 0.0
    %341 = vmatpush2.msra.mxu0 0.0
    %342 = vmatprep.subr.mxu0 0.0
    %343 = vmatpush2.msra.mxu0 0.0
    %344 = vmatprep.subr.mxu0 0.0
    %345 = vmatpush2.msra.mxu0 0.0
    %346 = vmatprep.subr.mxu0 0.0
    %347 = vmatpush2.msra.mxu0 0.0
    %348 = vmatprep.subr.mxu0 0.0
    %349 = vmatpush2.msra.mxu0 0.0
    %350 = vmatprep.mubr.f32.mxu0 0.0
    %v351 = vand.u32 %v61, 4294901760
    %v352 = vsub.f32 %v61, %v351
    %353 = vmatmul.mubr.f32.gmra.mxu0 %v352
    %v354 = vpop.f32.mrf.mxu0
    %v355 = vadd.f32 %v261, %v354
    %v356 = vpop.f32.mrf.mxu0
    %357 = vmatprep.mubr.f32.mxu0 0.0
    %v358 = vand.u32 %v64, 4294901760
    %v359 = vsub.f32 %v64, %v358
    %360 = vmatmul.mubr.f32.gmra.mxu0 %v359
    %v361 = vpop.f32.mrf.mxu0
    %v362 = vadd.f32 %v267, %v361
    %v363 = vpop.f32.mrf.mxu0
    %364 = vmatprep.mubr.f32.mxu0 0.0
    %v365 = vand.u32 %v67, 4294901760
    %v366 = vsub.f32 %v67, %v365
    %367 = vmatmul.mubr.f32.gmra.mxu0 %v366
    %v368 = vpop.f32.mrf.mxu0
    %v369 = vadd.f32 %v273, %v368
    %v370 = vpop.f32.mrf.mxu0
    %371 = vmatprep.mubr.f32.mxu0 0.0
    %v372 = vand.u32 %v70, 4294901760
    %v373 = vsub.f32 %v70, %v372
    %374 = vmatmul.mubr.f32.gmra.mxu0 %v373
    %v375 = vpop.f32.mrf.mxu0
    %v376 = vadd.f32 %v279, %v375
    %v377 = vpop.f32.mrf.mxu0
    %378 = vdwg.mxu0
    %379 = vmatprep.subr.mxu0 0.0
    %380 = vmatpush1.msra.mxu0 0.0
    %381 = vmatprep.subr.mxu0 0.0
    %382 = vmatpush1.msra.mxu0 0.0
    %383 = vmatprep.subr.mxu0 0.0
    %384 = vmatpush1.msra.mxu0 0.0
    %385 = vmatprep.subr.mxu0 0.0
    %386 = vmatpush1.msra.mxu0 0.0
    %387 = vmatprep.subr.mxu0 0.0
    %388 = vmatpush1.msra.mxu0 0.0
    %389 = vmatprep.subr.mxu0 0.0
    %390 = vmatpush1.msra.mxu0 0.0
    %391 = vmatprep.subr.mxu0 0.0
    %392 = vmatpush1.msra.mxu0 0.0
    %393 = vmatprep.subr.mxu0 0.0
    %394 = vmatpush1.msra.mxu0 0.0
    %395 = vmatprep.subr.mxu0 0.0
    %396 = vmatpush1.msra.mxu0 0.0
    %397 = vmatprep.subr.mxu0 0.0
    %398 = vmatpush1.msra.mxu0 0.0
    %399 = vmatprep.subr.mxu0 0.0
    %400 = vmatpush1.msra.mxu0 0.0
    %401 = vmatprep.subr.mxu0 0.0
    %402 = vmatpush1.msra.mxu0 0.0
    %403 = vmatprep.subr.mxu0 0.0
    %404 = vmatpush1.msra.mxu0 0.0
    %405 = vmatprep.subr.mxu0 0.0
    %406 = vmatpush1.msra.mxu0 0.0
    %407 = vmatprep.subr.mxu0 0.0
    %v408 = vand.u32 %v74, 4294901760
    %409 = vmatpush1.msra.mxu0 %v408
    %410 = vmatprep.subr.mxu0 0.0
    %v411 = vand.u32 %v45, 4294901760
    %412 = vmatpush1.msra.mxu0 %v411
    %413 = vmatprep.subr.mxu0 0.0
    %414 = vmatpush2.msra.mxu0 0.0
    %415 = vmatprep.subr.mxu0 0.0
    %416 = vmatpush2.msra.mxu0 0.0
    %417 = vmatprep.subr.mxu0 0.0
    %418 = vmatpush2.msra.mxu0 0.0
    %419 = vmatprep.subr.mxu0 0.0
    %420 = vmatpush2.msra.mxu0 0.0
    %421 = vmatprep.subr.mxu0 0.0
    %422 = vmatpush2.msra.mxu0 0.0
    %423 = vmatprep.subr.mxu0 0.0
    %424 = vmatpush2.msra.mxu0 0.0
    %425 = vmatprep.subr.mxu0 0.0
    %426 = vmatpush2.msra.mxu0 0.0
    %427 = vmatprep.subr.mxu0 0.0
    %428 = vmatpush2.msra.mxu0 0.0
    %429 = vmatprep.subr.mxu0 0.0
    %430 = vmatpush2.msra.mxu0 0.0
    %431 = vmatprep.subr.mxu0 0.0
    %432 = vmatpush2.msra.mxu0 0.0
    %433 = vmatprep.subr.mxu0 0.0
    %434 = vmatpush2.msra.mxu0 0.0
    %435 = vmatprep.subr.mxu0 0.0
    %436 = vmatpush2.msra.mxu0 0.0
    %437 = vmatprep.subr.mxu0 0.0
    %438 = vmatpush2.msra.mxu0 0.0
    %439 = vmatprep.subr.mxu0 0.0
    %440 = vmatpush2.msra.mxu0 0.0
    %441 = vmatprep.subr.mxu0 0.0
    %442 = vmatpush2.msra.mxu0 0.0
    %443 = vmatprep.subr.mxu0 0.0
    %444 = vmatpush2.msra.mxu0 0.0
    %445 = vmatprep.mubr.f32.mxu0 0.0
    %v446 = vand.u32 %v61, 4294901760
    %v447 = vsub.f32 %v61, %v446
    %v448 = vand.u32 %v447, 4294901760
    %449 = vmatmul.mubr.f32.gmra.mxu0 %v448
    %v450 = vpop.f32.mrf.mxu0
    %v451 = vadd.f32 %v355, %v450
    %v452 = vpop.f32.mrf.mxu0
    %453 = vmatprep.mubr.f32.mxu0 0.0
    %v454 = vand.u32 %v64, 4294901760
    %v455 = vsub.f32 %v64, %v454
    %v456 = vand.u32 %v455, 4294901760
    %457 = vmatmul.mubr.f32.gmra.mxu0 %v456
    %v458 = vpop.f32.mrf.mxu0
    %v459 = vadd.f32 %v362, %v458
    %v460 = vpop.f32.mrf.mxu0
    %461 = vmatprep.mubr.f32.mxu0 0.0
    %v462 = vand.u32 %v67, 4294901760
    %v463 = vsub.f32 %v67, %v462
    %v464 = vand.u32 %v463, 4294901760
    %465 = vmatmul.mubr.f32.gmra.mxu0 %v464
    %v466 = vpop.f32.mrf.mxu0
    %v467 = vadd.f32 %v369, %v466
    %v468 = vpop.f32.mrf.mxu0
    %469 = vmatprep.mubr.f32.mxu0 0.0
    %v470 = vand.u32 %v70, 4294901760
    %v471 = vsub.f32 %v70, %v470
    %v472 = vand.u32 %v471, 4294901760
    %473 = vmatmul.mubr.f32.gmra.mxu0 %v472
    %v474 = vpop.f32.mrf.mxu0
    %v475 = vadd.f32 %v376, %v474
    %v476 = vpop.f32.mrf.mxu0
    %477 = vdwg.mxu0
    %478 = vmatprep.subr.mxu0 0.0
    %479 = vmatpush1.msra.mxu0 0.0
    %480 = vmatprep.subr.mxu0 0.0
    %481 = vmatpush1.msra.mxu0 0.0
    %482 = vmatprep.subr.mxu0 0.0
    %483 = vmatpush1.msra.mxu0 0.0
    %484 = vmatprep.subr.mxu0 0.0
    %485 = vmatpush1.msra.mxu0 0.0
    %486 = vmatprep.subr.mxu0 0.0
    %487 = vmatpush1.msra.mxu0 0.0
    %488 = vmatprep.subr.mxu0 0.0
    %489 = vmatpush1.msra.mxu0 0.0
    %490 = vmatprep.subr.mxu0 0.0
    %491 = vmatpush1.msra.mxu0 0.0
    %492 = vmatprep.subr.mxu0 0.0
    %493 = vmatpush1.msra.mxu0 0.0
    %494 = vmatprep.subr.mxu0 0.0
    %495 = vmatpush1.msra.mxu0 0.0
    %496 = vmatprep.subr.mxu0 0.0
    %497 = vmatpush1.msra.mxu0 0.0
    %498 = vmatprep.subr.mxu0 0.0
    %499 = vmatpush1.msra.mxu0 0.0
    %500 = vmatprep.subr.mxu0 0.0
    %501 = vmatpush1.msra.mxu0 0.0
    %502 = vmatprep.subr.mxu0 0.0
    %503 = vmatpush1.msra.mxu0 0.0
    %504 = vmatprep.subr.mxu0 0.0
    %505 = vmatpush1.msra.mxu0 0.0
    %506 = vmatprep.subr.mxu0 0.0
    %v507 = vand.u32 %v74, 4294901760
    %v508 = vsub.f32 %v74, %v507
    %v509 = vand.u32 %v508, 4294901760
    %510 = vmatpush1.msra.mxu0 %v509
    %511 = vmatprep.subr.mxu0 0.0
    %v512 = vand.u32 %v45, 4294901760
    %v513 = vsub.f32 %v45, %v512
    %v514 = vand.u32 %v513, 4294901760
    %515 = vmatpush1.msra.mxu0 %v514
    %516 = vmatprep.subr.mxu0 0.0
    %517 = vmatpush2.msra.mxu0 0.0
    %518 = vmatprep.subr.mxu0 0.0
    %519 = vmatpush2.msra.mxu0 0.0
    %520 = vmatprep.subr.mxu0 0.0
    %521 = vmatpush2.msra.mxu0 0.0
    %522 = vmatprep.subr.mxu0 0.0
    %523 = vmatpush2.msra.mxu0 0.0
    %524 = vmatprep.subr.mxu0 0.0
    %525 = vmatpush2.msra.mxu0 0.0
    %526 = vmatprep.subr.mxu0 0.0
    %527 = vmatpush2.msra.mxu0 0.0
    %528 = vmatprep.subr.mxu0 0.0
    %529 = vmatpush2.msra.mxu0 0.0
    %530 = vmatprep.subr.mxu0 0.0
    %531 = vmatpush2.msra.mxu0 0.0
    %532 = vmatprep.subr.mxu0 0.0
    %533 = vmatpush2.msra.mxu0 0.0
    %534 = vmatprep.subr.mxu0 0.0
    %535 = vmatpush2.msra.mxu0 0.0
    %536 = vmatprep.subr.mxu0 0.0
    %537 = vmatpush2.msra.mxu0 0.0
    %538 = vmatprep.subr.mxu0 0.0
    %539 = vmatpush2.msra.mxu0 0.0
    %540 = vmatprep.subr.mxu0 0.0
    %541 = vmatpush2.msra.mxu0 0.0
    %542 = vmatprep.subr.mxu0 0.0
    %543 = vmatpush2.msra.mxu0 0.0
    %544 = vmatprep.subr.mxu0 0.0
    %545 = vmatpush2.msra.mxu0 0.0
    %546 = vmatprep.subr.mxu0 0.0
    %547 = vmatpush2.msra.mxu0 0.0
    %548 = vmatprep.mubr.f32.mxu0 0.0
    %v549 = vand.u32 %v61, 4294901760
    %550 = vmatmul.mubr.f32.gmra.mxu0 %v549
    %v551 = vpop.f32.mrf.mxu0
    %v552 = vadd.f32 %v451, %v551
    %v553 = vpop.f32.mrf.mxu0
    %554 = vmatprep.mubr.f32.mxu0 0.0
    %v555 = vand.u32 %v64, 4294901760
    %556 = vmatmul.mubr.f32.gmra.mxu0 %v555
    %v557 = vpop.f32.mrf.mxu0
    %v558 = vadd.f32 %v459, %v557
    %v559 = vpop.f32.mrf.mxu0
    %560 = vmatprep.mubr.f32.mxu0 0.0
    %v561 = vand.u32 %v67, 4294901760
    %562 = vmatmul.mubr.f32.gmra.mxu0 %v561
    %v563 = vpop.f32.mrf.mxu0
    %v564 = vadd.f32 %v467, %v563
    %v565 = vpop.f32.mrf.mxu0
    %566 = vmatprep.mubr.f32.mxu0 0.0
    %v567 = vand.u32 %v70, 4294901760
    %568 = vmatmul.mubr.f32.gmra.mxu0 %v567
    %v569 = vpop.f32.mrf.mxu0
    %v570 = vadd.f32 %v475, %v569
    %v571 = vpop.f32.mrf.mxu0
    %572 = vdwg.mxu0
    %573 = vmatprep.subr.mxu0 0.0
    %574 = vmatpush1.msra.mxu0 0.0
    %575 = vmatprep.subr.mxu0 0.0
    %576 = vmatpush1.msra.mxu0 0.0
    %577 = vmatprep.subr.mxu0 0.0
    %578 = vmatpush1.msra.mxu0 0.0
    %579 = vmatprep.subr.mxu0 0.0
    %580 = vmatpush1.msra.mxu0 0.0
    %581 = vmatprep.subr.mxu0 0.0
    %582 = vmatpush1.msra.mxu0 0.0
    %583 = vmatprep.subr.mxu0 0.0
    %584 = vmatpush1.msra.mxu0 0.0
    %585 = vmatprep.subr.mxu0 0.0
    %586 = vmatpush1.msra.mxu0 0.0
    %587 = vmatprep.subr.mxu0 0.0
    %588 = vmatpush1.msra.mxu0 0.0
    %589 = vmatprep.subr.mxu0 0.0
    %590 = vmatpush1.msra.mxu0 0.0
    %591 = vmatprep.subr.mxu0 0.0
    %592 = vmatpush1.msra.mxu0 0.0
    %593 = vmatprep.subr.mxu0 0.0
    %594 = vmatpush1.msra.mxu0 0.0
    %595 = vmatprep.subr.mxu0 0.0
    %596 = vmatpush1.msra.mxu0 0.0
    %597 = vmatprep.subr.mxu0 0.0
    %598 = vmatpush1.msra.mxu0 0.0
    %599 = vmatprep.subr.mxu0 0.0
    %600 = vmatpush1.msra.mxu0 0.0
    %601 = vmatprep.subr.mxu0 0.0
    %v602 = vand.u32 %v74, 4294901760
    %603 = vmatpush1.msra.mxu0 %v602
    %604 = vmatprep.subr.mxu0 0.0
    %v605 = vand.u32 %v45, 4294901760
    %606 = vmatpush1.msra.mxu0 %v605
    %607 = vmatprep.subr.mxu0 0.0
    %608 = vmatpush2.msra.mxu0 0.0
    %609 = vmatprep.subr.mxu0 0.0
    %610 = vmatpush2.msra.mxu0 0.0
    %611 = vmatprep.subr.mxu0 0.0
    %612 = vmatpush2.msra.mxu0 0.0
    %613 = vmatprep.subr.mxu0 0.0
    %614 = vmatpush2.msra.mxu0 0.0
    %615 = vmatprep.subr.mxu0 0.0
    %616 = vmatpush2.msra.mxu0 0.0
    %617 = vmatprep.subr.mxu0 0.0
    %618 = vmatpush2.msra.mxu0 0.0
    %619 = vmatprep.subr.mxu0 0.0
    %620 = vmatpush2.msra.mxu0 0.0
    %621 = vmatprep.subr.mxu0 0.0
    %622 = vmatpush2.msra.mxu0 0.0
    %623 = vmatprep.subr.mxu0 0.0
    %624 = vmatpush2.msra.mxu0 0.0
    %625 = vmatprep.subr.mxu0 0.0
    %626 = vmatpush2.msra.mxu0 0.0
    %627 = vmatprep.subr.mxu0 0.0
    %628 = vmatpush2.msra.mxu0 0.0
    %629 = vmatprep.subr.mxu0 0.0
    %630 = vmatpush2.msra.mxu0 0.0
    %631 = vmatprep.subr.mxu0 0.0
    %632 = vmatpush2.msra.mxu0 0.0
    %633 = vmatprep.subr.mxu0 0.0
    %634 = vmatpush2.msra.mxu0 0.0
    %635 = vmatprep.subr.mxu0 0.0
    %636 = vmatpush2.msra.mxu0 0.0
    %637 = vmatprep.subr.mxu0 0.0
    %638 = vmatpush2.msra.mxu0 0.0
    %639 = vmatprep.mubr.f32.mxu0 0.0
    %v640 = vand.u32 %v61, 4294901760
    %641 = vmatmul.mubr.f32.gmra.mxu0 %v640
    %v642 = vpop.f32.mrf.mxu0
    %v643 = vadd.f32 %v552, %v642
    %v644 = vpop.f32.mrf.mxu0
    %645 = vmatprep.mubr.f32.mxu0 0.0
    %v646 = vand.u32 %v64, 4294901760
    %647 = vmatmul.mubr.f32.gmra.mxu0 %v646
    %v648 = vpop.f32.mrf.mxu0
    %v649 = vadd.f32 %v558, %v648
    %v650 = vpop.f32.mrf.mxu0
    %651 = vmatprep.mubr.f32.mxu0 0.0
    %v652 = vand.u32 %v67, 4294901760
    %653 = vmatmul.mubr.f32.gmra.mxu0 %v652
    %v654 = vpop.f32.mrf.mxu0
    %v655 = vadd.f32 %v564, %v654
    %v656 = vpop.f32.mrf.mxu0
    %657 = vmatprep.mubr.f32.mxu0 0.0
    %v658 = vand.u32 %v70, 4294901760
    %659 = vmatmul.mubr.f32.gmra.mxu0 %v658
    %v660 = vpop.f32.mrf.mxu0
    %v661 = vadd.f32 %v570, %v660
    %v662 = vpop.f32.mrf.mxu0
    %663 = vdwg.mxu0
    %v664 = vadd.f32 %v55, %v643
    %v665 = vadd.f32 %v56, %v649
    %v666 = vadd.f32 %v57, %v655
    %v667 = vadd.f32 %v58, %v661
    %668 = vst [vmem:[#allocation2] sm:$0xff] %v664
    %669 = vst [vmem:[#allocation2 + $0x8] sm:$0xff] %v665
    %670 = vst [vmem:[#allocation2 + $0x10] sm:$0xff] %v666
    %671 = vst [vmem:[#allocation2 + $0x18] sm:$0xff] %v667
    // Predicated region
    $region14: #{_embedding_lookup.1} parent=1 // pred_check
      %p672 = pneg %p12
    $region15: #{_embedding_lookup.1} parent=1 // pred_check_branch
      %674 = sbr.rel (%p672) target = $region17
    $region16: #{_embedding_lookup.1} parent=1 // pred_region
      %v675 = vld [vmem:[#allocation2] sm:$0xff]
      %v676 = vld [vmem:[#allocation2 + $0x8] sm:$0xff]
      %v677 = vld [vmem:[#allocation2 + $0x10] sm:$0xff]
      %v678 = vld [vmem:[#allocation2 + $0x18] sm:$0xff]
      %679 = vst [vmem:[#allocation3] sm:$0xff] %v675
      %680 = vst [vmem:[#allocation3 + $0x8] sm:$0xff] %v676
      %681 = vst [vmem:[#allocation3 + $0x10] sm:$0xff] %v677
      %682 = vst [vmem:[#allocation3 + $0x18] sm:$0xff] %v678
    $region17: #{_embedding_lookup.1} parent=1 // pred_fallthru
      _
    // Predicated region
    $region18: #{_embedding_lookup.1} parent=1 // pred_check
      _
    $region19: #{_embedding_lookup.1} parent=1 // pred_check_branch
      %684 = sbr.rel (0) target = $region21
    $region20: #{_embedding_lookup.1} parent=1 // pred_region
      %s686 = ssub.s32 512, 512
      %687 = vsyncadd [#allocation4], %s686
      %s688 = sshll.u32 [#allocation3], 4
      %s689 = int_to_ptr.vmem [resolvable:$true] %s688
      %694 = dma.vmem_to_hbm [thread:$0]  %s689, 512, %s2, [#allocation4], 128, 128, 8
    $region21: #{_embedding_lookup.1} parent=1 // pred_fallthru
      _
    // Predicated region
    $region22: #{_embedding_lookup.1} parent=1 // pred_check
      _
    $region23: #{_embedding_lookup.1} parent=1 // pred_check_branch
      %696 = sbr.rel (0) target = $region25
    $region24: #{_embedding_lookup.1} parent=1 // pred_region
      %697 = dma.done [#allocation4], 512
    $region25: #{_embedding_lookup.1} parent=1 // pred_fallthru
      _
    %698 = vsyncpa [#allocation4], 1

</llo_original>
